<compile_context>
chip_gen: v5e
topology: v5e:2x2
jax: 0.10.0
libtpu: 0.0.40
codegen_flags: <defaults>
</compile_context>

<pallas_src>
import jax
import jax.numpy as jnp
from jax.experimental import pallas as pl
from jax.experimental.pallas import tpu as pltpu


def _round_up(x, m):
    return ((x + m - 1) // m) * m


# ----------------------------------------------------------------------------
# Hardware queries (best-effort; safe fallbacks so the wrapper never crashes).
# ----------------------------------------------------------------------------
def _vmem_capacity_bytes():
    try:
        return int(pltpu.get_tpu_info().vmem_capacity_bytes)
    except Exception:
        return 128 * 1024 * 1024  # v5e/v6e physical VMEM


def _vmem_plan():
    """Return (vmem_limit_bytes, usable_budget_bytes, looks_like_two_core)."""
    cap = _vmem_capacity_bytes()
    limit = int(cap * 0.70)              # ~90 MiB on 128 MiB parts, ~45 MiB on v7x
    budget = limit - 4 * 1024 * 1024     # headroom for compiler internal scratch
    two_core = cap <= 64 * 1024 * 1024   # v7x-like: 64 MiB VMEM, 2 TCs/chip
    return limit, budget, two_core


def _probe_single_buffering():
    """Is pipeline_mode=pl.Buffered(1) available for grid-invariant operands?"""
    try:
        pl.BlockSpec((8, 128), lambda i: (0, 0), pipeline_mode=pl.Buffered(1))
        return True
    except Exception:
        return False


_SINGLE_BUF = _probe_single_buffering()


def _make_spec(shape, index_map, single_buffer=False):
    if single_buffer and _SINGLE_BUF:
        return pl.BlockSpec(shape, index_map, pipeline_mode=pl.Buffered(1))
    return pl.BlockSpec(shape, index_map)


# ----------------------------------------------------------------------------
# Kernels
# ----------------------------------------------------------------------------
def _highway_kernel(x_ref, w_ref, b_ref, o_ref):
    # One fused [block_b, Dp] x [Dp, 2*Dp] MXU matmul, f32 accumulation.
    x = x_ref[...]
    h = jnp.dot(x, w_ref[...], preferred_element_type=jnp.float32)
    h = h + b_ref[...].astype(jnp.float32)

    d = o_ref.shape[-1]                 # padded feature width (multiple of 128)
    g = jnp.maximum(h[:, :d], 0.0)      # relu(fc1(x))      (VPU)
    t = jax.nn.sigmoid(h[:, d:])        # sigmoid(fc2(x))   (EUP)

    xf = x.astype(jnp.float32)
    # out = g*t + (1-t)*x  ==  t*(g - x) + x   (one fewer vmul / live f32 temp)
    o_ref[...] = (t * (g - xf) + xf).astype(o_ref.dtype)


def _highway_kernel_ktiled(x_ref, w_ref, b_ref, o_ref, acc_ref):
    # K-streamed variant: the weight tile is (tk, 2*Dp); the fused pre-
    # activation h is accumulated in an f32 VMEM scratch across the K axis.
    k = pl.program_id(1)
    tk = w_ref.shape[0]

    @pl.when(k == 0)
    def _():
        acc_ref[...] = jnp.zeros_like(acc_ref)

    start = pl.multiple_of(k * tk, 128)
    xs = x_ref[:, pl.ds(start, tk)]
    acc_ref[...] += jnp.dot(xs, w_ref[...], preferred_element_type=jnp.float32)

    @pl.when(k == pl.num_programs(1) - 1)
    def _():
        h = acc_ref[...] + b_ref[...].astype(jnp.float32)
        d = o_ref.shape[-1]
        g = jnp.maximum(h[:, :d], 0.0)
        t = jax.nn.sigmoid(h[:, d:])
        xf = x_ref[...].astype(jnp.float32)
        o_ref[...] = (t * (g - xf) + xf).astype(o_ref.dtype)


# ----------------------------------------------------------------------------
# Parameter fusion (do this ONCE per parameter set, outside the hot path).
# ----------------------------------------------------------------------------
def fuse_highway_weights(w1, b1, w2, b2, compute_dtype=None):
    """Fuse fc1/fc2 into one [Dp, 2*Dp] weight and [1, 2*Dp] bias.

    w1, w2: [D, D] (PyTorch weight.T); b1, b2: [1, D] or [D].
    Optionally cast to compute_dtype (e.g. jnp.bfloat16) for full-rate MXU.
    Returns (w12, b12, D).
    """
    D = w1.shape[0]
    assert w1.shape == (D, D) and w2.shape == (D, D), "highway requires in==out"
    Dp = _round_up(max(D, 128), 128)
    b1 = jnp.asarray(b1).reshape(1, D)
    b2 = jnp.asarray(b2).reshape(1, D)
    if Dp == D:
        w12 = jnp.concatenate([w1, w2], axis=1)
        b12 = jnp.concatenate([b1, b2], axis=1)
    else:
        w12 = jnp.zeros((Dp, 2 * Dp), w1.dtype)
        w12 = w12.at[:D, :D].set(w1).at[:D, Dp:Dp + D].set(w2)
        b12 = jnp.zeros((1, 2 * Dp), b1.dtype)
        b12 = b12.at[:, :D].set(b1).at[:, Dp:Dp + D].set(b2)
    if compute_dtype is not None:
        w12 = w12.astype(compute_dtype)
        b12 = b12.astype(compute_dtype)
    return w12, b12, D


# ----------------------------------------------------------------------------
# Forward pass
# ----------------------------------------------------------------------------
def highway_fused(x, w12, b12, d_out, *, block_b=None, block_k=None):
    """Highway forward with pre-fused weights.

    x: [B, D]; w12: [Dp, 2*Dp]; b12: [1, 2*Dp]; d_out == D. Returns [B, D].
    """
    B, D = x.shape
    Dp = w12.shape[0]
    assert d_out == D and D <= Dp
    assert w12.shape == (Dp, 2 * Dp) and b12.shape == (1, 2 * Dp)

    vmem_limit, budget, two_core = _vmem_plan()
    x_itemsize = jnp.dtype(x.dtype).itemsize
    w_itemsize = jnp.dtype(w12.dtype).itemsize
    w_bytes = (2 * Dp * Dp + 2 * Dp) * w_itemsize
    w_buffers = 1 if _SINGLE_BUF else 2

    # Feature/K padding only (lane-dense layout + zero rows for the matmul K);
    # no batch padding — Pallas masks the ragged last batch block.
    x_in = x if D == Dp else jnp.pad(x, ((0, 0), (0, Dp - D)))

    # K-tiling when the fused weight cannot sit comfortably resident in VMEM.
    use_ktile = (block_k is not None) or (w_buffers * w_bytes > budget // 3)

    # ---- batch tile selection ----
    if block_b is None:
        if two_core and B >= 16:
            target = _round_up(pl.cdiv(B, 2), 8)   # give both v7x TCs work
        else:
            target = _round_up(B, 8)               # single TC: one big tile
        block_b = min(512, target)
        if block_b >= 256:
            block_b = (block_b // 256) * 256       # MXU-friendly M tiles
    block_b = max(8, _round_up(block_b, 8))

    if not use_ktile:
        def tile_bytes(bb):
            xb = 2 * bb * Dp * x_itemsize          # x tile (double-buffered)
            ob = 2 * bb * Dp * x_itemsize          # out tile (double-buffered)
            f32 = 6 * bb * Dp * 4                  # h(2*Dp) + g/t/xf live f32
            return xb + ob + f32

        while block_b > 8 and w_buffers * w_bytes + tile_bytes(block_b) > budget:
            block_b = _round_up(block_b // 2, 8)
        if w_buffers * w_bytes + tile_bytes(block_b) > budget:
            use_ktile = True                       # weight alone too big: stream it

    if use_ktile:
        if block_k is None:
            block_k = 128
            for cand in (512, 256):
                if Dp % cand == 0 and 2 * cand * 2 * Dp * w_itemsize <= budget // 3:
                    block_k = cand
                    break
        assert Dp % block_k == 0 and block_k % 128 == 0

        def tile_bytes_k(bb):
            xb = 2 * bb * Dp * x_itemsize          # full x rows (grid-invariant in k)
            ob = 2 * bb * Dp * x_itemsize
            acc = bb * 2 * Dp * 4                  # f32 accumulator scratch
            wtile = 2 * block_k * 2 * Dp * w_itemsize
            btile = 2 * 2 * Dp * w_itemsize
            f32 = 4 * bb * Dp * 4                  # epilogue g/t/xf/out
            return xb + ob + acc + wtile + btile + f32

        while block_b > 8 and tile_bytes_k(block_b) > budget:
            block_b = _round_up(block_b // 2, 8)

    grid_b = pl.cdiv(B, block_b)
    cost = pl.CostEstimate(
        flops=2 * B * Dp * (2 * Dp) + 8 * B * Dp,
        transcendentals=B * Dp,                    # sigmoid exp
        bytes_accessed=2 * B * Dp * x_itemsize + w_bytes,  # x read + out write + W
    )

    if not use_ktile:
        out = pl.pallas_call(
            _highway_kernel,
            out_shape=jax.ShapeDtypeStruct((B, Dp), x.dtype),
            grid_spec=pltpu.PrefetchScalarGridSpec(
                num_scalar_prefetch=0,
                grid=(grid_b,),
                in_specs=[
                    pl.BlockSpec((block_b, Dp), lambda i: (i, 0)),       # x tile
                    _make_spec((Dp, 2 * Dp), lambda i: (0, 0), True),    # fused W (1 buf)
                    _make_spec((1, 2 * Dp), lambda i: (0, 0), True),     # fused bias
                ],
                out_specs=pl.BlockSpec((block_b, Dp), lambda i: (i, 0)),
            ),
            compiler_params=pltpu.CompilerParams(
                dimension_semantics=("parallel",),
                vmem_limit_bytes=vmem_limit,
            ),
            cost_estimate=cost,
        )(x_in, w12, b12)
    else:
        n_k = Dp // block_k
        out = pl.pallas_call(
            _highway_kernel_ktiled,
            out_shape=jax.ShapeDtypeStruct((B, Dp), x.dtype),
            grid_spec=pltpu.PrefetchScalarGridSpec(
                num_scalar_prefetch=0,
                grid=(grid_b, n_k),
                in_specs=[
                    pl.BlockSpec((block_b, Dp), lambda i, k: (i, 0)),       # full x rows
                    pl.BlockSpec((block_k, 2 * Dp), lambda i, k: (k, 0)),   # streamed W
                    _make_spec((1, 2 * Dp), lambda i, k: (0, 0), True),     # fused bias
                ],
                out_specs=pl.BlockSpec((block_b, Dp), lambda i, k: (i, 0)),
                scratch_shapes=[pltpu.VMEM((block_b, 2 * Dp), jnp.float32)],
            ),
            compiler_params=pltpu.CompilerParams(
                dimension_semantics=("parallel", "arbitrary"),
                vmem_limit_bytes=vmem_limit,
            ),
            cost_estimate=cost,
        )(x_in, w12, b12)

    if D != Dp:
        out = out[:, :D]
    return out


def highway(x, w1, b1, w2, b2, **kwargs):
    """Convenience wrapper (re-fuses weights every call; prefer calling
    fuse_highway_weights() once and highway_fused() in the hot path)."""
    w12, b12, D = fuse_highway_weights(w1, b1, w2, b2)
    return highway_fused(x, w12, b12, D, **kwargs)


def highway_ref(x, w1, b1, w2, b2):
    """Pure-JAX reference (intended, bug-fixed semantics of the module)."""
    g = jax.nn.relu(x @ w1 + b1)
    t = jax.nn.sigmoid(x @ w2 + b2)
    return g * t + (1.0 - t) * x


if __name__ == "__main__":
    key = jax.random.PRNGKey(0)

    def make_params(k, D, dtype=jnp.float32):
        kw1, kb1, kw2, kb2 = jax.random.split(k, 4)
        s = 1.0 / jnp.sqrt(jnp.float32(D))
        w1 = jax.random.uniform(kw1, (D, D), dtype, -s, s)   # PyTorch weight.T
        b1 = jax.random.uniform(kb1, (1, D), dtype, -s, s)
        w2 = jax.random.uniform(kw2, (D, D), dtype, -s, s)
        b2 = jax.random.uniform(kb2, (1, D), dtype, -s, s)
        return w1, b1, w2, b2

    k1, k2, k3, k4, kp1, kp2, kp3, kp4 = jax.random.split(key, 8)

    # 1) small, feature-padded path (D=32 -> Dp=128), single batch tile
    B, D = 8, 32
    x = jax.random.normal(k1, (B, D), jnp.float32)
    w1, b1, w2, b2 = make_params(kp1, D)
    out = highway(x, w1, b1, w2, b2)
    jax.block_until_ready(out)
    ref = highway_ref(x, w1, b1, w2, b2)
    assert out.shape == (B, D)
    assert jnp.allclose(out, ref, atol=1e-5, rtol=1e-5)

    # 2) lane-exact D=128, pre-fused weights (fusion hoisted out of the call)
    B2, D2 = 64, 128
    x2 = jax.random.normal(k2, (B2, D2), jnp.float32)
    p2 = make_params(kp2, D2)
    w12_2, b12_2, d2 = fuse_highway_weights(*p2)
    out2 = highway_fused(x2, w12_2, b12_2, d2)
    jax.block_until_ready(out2)
    ref2 = highway_ref(x2, *p2)
    assert out2.shape == (B2, D2)
    assert jnp.allclose(out2, ref2, atol=1e-4, rtol=1e-4)

    # 3) K-tiled accumulator path (forced small block_k to exercise it)
    B3, D3 = 16, 256
    x3 = jax.random.normal(k3, (B3, D3), jnp.float32)
    p3 = make_params(kp3, D3)
    w12_3, b12_3, d3 = fuse_highway_weights(*p3)
    out3 = highway_fused(x3, w12_3, b12_3, d3, block_k=128)
    jax.block_until_ready(out3)
    ref3 = highway_ref(x3, *p3)
    assert out3.shape == (B3, D3)
    assert jnp.allclose(out3, ref3, atol=1e-4, rtol=1e-4)

    # 4) ragged batch: no wrapper-side batch padding; Pallas masks last block
    B4, D4 = 40, 128
    x4 = jax.random.normal(k4, (B4, D4), jnp.float32)
    p4 = make_params(kp4, D4)
    w12_4, b12_4, d4 = fuse_highway_weights(*p4)
    out4 = highway_fused(x4, w12_4, b12_4, d4, block_b=16)
    jax.block_until_ready(out4)
    ref4 = highway_ref(x4, *p4)
    assert out4.shape == (B4, D4)
    assert jnp.allclose(out4, ref4, atol=1e-4, rtol=1e-4)

    print("KERNEL_OK")
</pallas_src>

<mosaic_0001>
module attributes {stable_mosaic.version = 11 : i64} {
  func.func @_highway_kernel(%arg0: i32, %arg1: memref<8x128xf32, #tpu.memory_space<vmem>>, %arg2: memref<128x256xf32, #tpu.memory_space<vmem>>, %arg3: memref<1x256xf32, #tpu.memory_space<vmem>>, %arg4: memref<8x128xf32, #tpu.memory_space<vmem>>) attributes {dimension_semantics = [#tpu.dimension_semantics<parallel>], iteration_bounds = array<i64: 1>, scalar_prefetch = 0 : i64, scratch_operands = 0 : i64, tpu.core_type = #tpu.core_type<tc>, window_params = [{transform_indices = @transform_0, window_bounds = array<i64: 8, 128>}, {pipeline_mode = #tpu.pipeline_mode<synchronous>, transform_indices = @transform_1, window_bounds = array<i64: 128, 256>}, {pipeline_mode = #tpu.pipeline_mode<synchronous>, transform_indices = @transform_2, window_bounds = array<i64: 1, 256>}, {transform_indices = @transform_3, window_bounds = array<i64: 8, 128>}]} {
    %c0 = arith.constant 0 : index
    %c0_0 = arith.constant 0 : index
    %0 = vector.load %arg1[%c0, %c0_0] : memref<8x128xf32, #tpu.memory_space<vmem>>, vector<8x128xf32>
    %c0_1 = arith.constant 0 : index
    %c0_2 = arith.constant 0 : index
    %1 = vector.load %arg2[%c0_1, %c0_2] : memref<128x256xf32, #tpu.memory_space<vmem>>, vector<128x256xf32>
    %cst = arith.constant dense<0.000000e+00> : vector<8x256xf32>
    %2 = tpu.matmul %0, %1, %cst {dimension_numbers = #tpu.dot_dimension_numbers<[1], [0], [0], [1], [0, 0, 1, 1], [], []>} : vector<8x128xf32>, vector<128x256xf32>, vector<8x256xf32> -> vector<8x256xf32>
    %c0_3 = arith.constant 0 : index
    %c0_4 = arith.constant 0 : index
    %3 = vector.load %arg3[%c0_3, %c0_4] : memref<1x256xf32, #tpu.memory_space<vmem>>, vector<1x256xf32>
    %4 = vector.broadcast %3 : vector<1x256xf32> to vector<8x256xf32>
    %5 = arith.addf %2, %4 : vector<8x256xf32>
    %6 = vector.extract_strided_slice %5 {offsets = [0, 0], sizes = [8, 128], strides = [1, 1]} : vector<8x256xf32> to vector<8x128xf32>
    %cst_5 = arith.constant 0.000000e+00 : f32
    %7 = vector.broadcast %cst_5 : f32 to vector<8x128xf32>
    %8 = arith.maximumf %6, %7 : vector<8x128xf32>
    %9 = vector.extract_strided_slice %5 {offsets = [0, 128], sizes = [8, 128], strides = [1, 1]} : vector<8x256xf32> to vector<8x128xf32>
    %10 = arith.negf %9 : vector<8x128xf32>
    %11 = math.exp %10 : vector<8x128xf32>
    %cst_6 = arith.constant 1.000000e+00 : f32
    %12 = vector.broadcast %cst_6 : f32 to vector<8x128xf32>
    %13 = arith.addf %12, %11 : vector<8x128xf32>
    %14 = arith.divf %12, %13 : vector<8x128xf32>
    %15 = arith.subf %8, %0 : vector<8x128xf32>
    %16 = arith.mulf %14, %15 : vector<8x128xf32>
    %17 = arith.addf %16, %0 : vector<8x128xf32>
    %c0_7 = arith.constant 0 : index
    %c0_8 = arith.constant 0 : index
    %18 = vector.load %arg4[%c0_7, %c0_8] : memref<8x128xf32, #tpu.memory_space<vmem>>, vector<8x128xf32>
    tpu.vector_store %arg4[%c0_7, %c0_8], %17 {strides = array<i32>} : memref<8x128xf32, #tpu.memory_space<vmem>>, vector<8x128xf32>,
    return
  }
  func.func @transform_0(%arg0: i32) -> (i32, i32) {
    %c0_i32 = arith.constant 0 : i32
    %c0_i32_0 = arith.constant 0 : i32
    return %arg0, %c0_i32 : i32, i32
  }
  func.func @transform_1(%arg0: i32) -> (i32, i32) {
    %c0_i32 = arith.constant 0 : i32
    %c0_i32_0 = arith.constant 0 : i32
    %c0_i32_1 = arith.constant 0 : i32
    return %c0_i32, %c0_i32_0 : i32, i32
  }
  func.func @transform_2(%arg0: i32) -> (i32, i32) {
    %c0_i32 = arith.constant 0 : i32
    %c0_i32_0 = arith.constant 0 : i32
    %c0_i32_1 = arith.constant 0 : i32
    return %c0_i32, %c0_i32_0 : i32, i32
  }
  func.func @transform_3(%arg0: i32) -> (i32, i32) {
    %c0_i32 = arith.constant 0 : i32
    %c0_i32_0 = arith.constant 0 : i32
    return %arg0, %c0_i32 : i32, i32
  }
}

</mosaic_0001>

<llo_original>
// kernel: tpu_custom_call.1
$region0: #{tpu_custom_call.1}
  #allocation0 [shape = 'u32[]', space=smem, size = 0x4, offset = 0x4, fixed_abs, tag = 'smem constant byte address 0x4 - core index']
  #allocation1 [shape = 'u32[72,128]{1,0:T(1,128)}', space=vmem, size = 0x9000, scoped, tag = 'internal scratch']
  %s0 = inlined_call_operand.hbm [shape: f32[8,128], index: 0, kind: input, shape index: {}]
  %s1 = inlined_call_operand.hbm [shape: f32[128,256], index: 1, kind: input, shape index: {}]
  %s2 = inlined_call_operand.hbm [shape: f32[1,256], index: 2, kind: input, shape index: {}]
  %s3 = inlined_call_operand.hbm [shape: f32[8,128], index: 3, kind: output, shape index: {}]
  %s4 = sld [smem:[#allocation0]]
  $region34: #{tpu_custom_call.1} parent=0
    _
  %s6 = ssub.s32 1, %s4
  %s7 = scalar_select 0, %s6, %s4
  $region1: #{tpu_custom_call.1} parent=0
    #allocation2 [shape = 'u8[4096]{0}', space=vmem, size = 0x1000, scoped, tag = 'input window, operand 0, single buffered']
    #allocation3 [shape = 's32[1]{0}', space=sflag, size = 0x4, scoped, tag = 'scoped memory for tpu_custom_call.1']
    #allocation4 [shape = 's32[1]{0}', space=sflag, size = 0x4, scoped, tag = 'scoped memory for tpu_custom_call.1']
    #allocation5 [shape = 'u8[131072]{0}', space=vmem, size = 0x20000, scoped, tag = 'input window, operand 1, single buffered']
    #allocation6 [shape = 's32[1]{0}', space=sflag, size = 0x4, scoped, tag = 'scoped memory for tpu_custom_call.1']
    #allocation7 [shape = 'u8[1024]{0}', space=vmem, size = 0x400, scoped, tag = 'input window, operand 2, single buffered']
    #allocation8 [shape = 'u8[4096]{0}', space=vmem, size = 0x1000, scoped, tag = 'output window, operand 0, single buffered']
    %8 = vsyncpa [#allocation3], 0
    %9 = vsyncpa [#allocation6], 0
    %10 = vsyncpa [#allocation4], 0
    // Predicated region
    $region2: #{tpu_custom_call.1} parent=1 // pred_check
      _
    $region3: #{tpu_custom_call.1} parent=1 // pred_check_branch
      %12 = sbr.rel (0) target = $region5
    $region4: #{tpu_custom_call.1} parent=1 // pred_region
      %14 = vsyncadd [#allocation3], 0
      %s16 = sshll.u32 %s0, 4
      %s17 = int_to_ptr.hbm [resolvable:$true] %s16
      %s18 = sshll.u32 [#allocation2], 4
      %s19 = int_to_ptr.vmem [resolvable:$true] %s18
      %21 = dma.hbm_to_vmem [thread:$0]  %s17, 128, %s19, [#allocation3]
    $region5: #{tpu_custom_call.1} parent=1 // pred_fallthru
      _
    // Predicated region
    $region6: #{tpu_custom_call.1} parent=1 // pred_check
      _
    $region7: #{tpu_custom_call.1} parent=1 // pred_check_branch
      %23 = sbr.rel (0) target = $region9
    $region8: #{tpu_custom_call.1} parent=1 // pred_region
      %25 = vsyncadd [#allocation6], 0
      %s26 = sshll.u32 %s1, 4
      %s27 = int_to_ptr.hbm [resolvable:$true] %s26
      %s28 = sshll.u32 [#allocation5], 4
      %s29 = int_to_ptr.vmem [resolvable:$true] %s28
      %34 = dma.hbm_to_vmem [thread:$0]  %s27, 4096, %s29, [#allocation6], 256, 256, 16
    $region9: #{tpu_custom_call.1} parent=1 // pred_fallthru
      _
    // Predicated region
    $region10: #{tpu_custom_call.1} parent=1 // pred_check
      _
    $region11: #{tpu_custom_call.1} parent=1 // pred_check_branch
      %36 = sbr.rel (0) target = $region13
    $region12: #{tpu_custom_call.1} parent=1 // pred_region
      %38 = vsyncadd [#allocation6], 0
      %s40 = sshll.u32 %s2, 4
      %s41 = int_to_ptr.hbm [resolvable:$true] %s40
      %s42 = sshll.u32 [#allocation7], 4
      %s43 = int_to_ptr.vmem [resolvable:$true] %s42
      %45 = dma.hbm_to_vmem [thread:$0]  %s41, 32, %s43, [#allocation6]
    $region13: #{tpu_custom_call.1} parent=1 // pred_fallthru
      _
    // Predicated region
    $region14: #{tpu_custom_call.1} parent=1 // pred_check
      _
    $region15: #{tpu_custom_call.1} parent=1 // pred_check_branch
      %47 = sbr.rel (0) target = $region17
    $region16: #{tpu_custom_call.1} parent=1 // pred_region
      %49 = dma.done [#allocation3], 128
    $region17: #{tpu_custom_call.1} parent=1 // pred_fallthru
      _
    // Predicated region
    $region18: #{tpu_custom_call.1} parent=1 // pred_check
      _
    $region19: #{tpu_custom_call.1} parent=1 // pred_check_branch
      %51 = sbr.rel (0) target = $region21
    $region20: #{tpu_custom_call.1} parent=1 // pred_region
      %53 = dma.done [#allocation6], 4096
    $region21: #{tpu_custom_call.1} parent=1 // pred_fallthru
      _
    // Predicated region
    $region22: #{tpu_custom_call.1} parent=1 // pred_check
      _
    $region23: #{tpu_custom_call.1} parent=1 // pred_check_branch
      %55 = sbr.rel (0) target = $region25
    $region24: #{tpu_custom_call.1} parent=1 // pred_region
      %57 = dma.done [#allocation6], 32
    $region25: #{tpu_custom_call.1} parent=1 // pred_fallthru
      _
    %v58 = vld [vmem:[#allocation2] sm:$0xff]
    %v59 = vld [vmem:[#allocation5] sm:$0xff]
    %v60 = vld [vmem:[#allocation5 + $0x8] sm:$0xff]
    %v61 = vld [vmem:[#allocation5 + $0x10] sm:$0xff]
    %v62 = vld [vmem:[#allocation5 + $0x18] sm:$0xff]
    %v63 = vld [vmem:[#allocation5 + $0x20] sm:$0xff]
    %v64 = vld [vmem:[#allocation5 + $0x28] sm:$0xff]
    %v65 = vld [vmem:[#allocation5 + $0x30] sm:$0xff]
    %v66 = vld [vmem:[#allocation5 + $0x38] sm:$0xff]
    %v67 = vld [vmem:[#allocation5 + $0x40] sm:$0xff]
    %v68 = vld [vmem:[#allocation5 + $0x48] sm:$0xff]
    %v69 = vld [vmem:[#allocation5 + $0x50] sm:$0xff]
    %v70 = vld [vmem:[#allocation5 + $0x58] sm:$0xff]
    %v71 = vld [vmem:[#allocation5 + $0x60] sm:$0xff]
    %v72 = vld [vmem:[#allocation5 + $0x68] sm:$0xff]
    %v73 = vld [vmem:[#allocation5 + $0x70] sm:$0xff]
    %v74 = vld [vmem:[#allocation5 + $0x78] sm:$0xff]
    %v75 = vld [vmem:[#allocation5 + $0x80] sm:$0xff]
    %v76 = vld [vmem:[#allocation5 + $0x88] sm:$0xff]
    %v77 = vld [vmem:[#allocation5 + $0x90] sm:$0xff]
    %v78 = vld [vmem:[#allocation5 + $0x98] sm:$0xff]
    %v79 = vld [vmem:[#allocation5 + $0xa0] sm:$0xff]
    %v80 = vld [vmem:[#allocation5 + $0xa8] sm:$0xff]
    %v81 = vld [vmem:[#allocation5 + $0xb0] sm:$0xff]
    %v82 = vld [vmem:[#allocation5 + $0xb8] sm:$0xff]
    %v83 = vld [vmem:[#allocation5 + $0xc0] sm:$0xff]
    %v84 = vld [vmem:[#allocation5 + $0xc8] sm:$0xff]
    %v85 = vld [vmem:[#allocation5 + $0xd0] sm:$0xff]
    %v86 = vld [vmem:[#allocation5 + $0xd8] sm:$0xff]
    %v87 = vld [vmem:[#allocation5 + $0xe0] sm:$0xff]
    %v88 = vld [vmem:[#allocation5 + $0xe8] sm:$0xff]
    %v89 = vld [vmem:[#allocation5 + $0xf0] sm:$0xff]
    %v90 = vld [vmem:[#allocation5 + $0xf8] sm:$0xff]
    %v91 = vld [vmem:[#allocation7] sm:$0x3]
    %v93 = vperm.slane %v91, 0
    %v94 = vperm.slane %v91, 1
    %97 = vmatpush.msra.mxu0 %v89
    %98 = vmatpush.msra.mxu0 %v87
    %99 = vmatpush.msra.mxu0 %v85
    %100 = vmatpush.msra.mxu0 %v83
    %101 = vmatpush.msra.mxu0 %v81
    %102 = vmatpush.msra.mxu0 %v79
    %103 = vmatpush.msra.mxu0 %v77
    %104 = vmatpush.msra.mxu0 %v75
    %105 = vmatpush.msra.mxu0 %v73
    %106 = vmatpush.msra.mxu0 %v71
    %107 = vmatpush.msra.mxu0 %v69
    %108 = vmatpush.msra.mxu0 %v67
    %109 = vmatpush.msra.mxu0 %v65
    %110 = vmatpush.msra.mxu0 %v63
    %111 = vmatpush.msra.mxu0 %v61
    %112 = vmatpush.msra.mxu0 %v59
    %113 = vmatmul.f32.gmra.mxu0 %v58
    %v114 = vpop.f32.mrf.mxu0
    %v115 = vadd.f32 %v93, %v114
    %116 = vdwg.mxu0
    %117 = vmatpush.msra.mxu0 %v90
    %118 = vmatpush.msra.mxu0 %v88
    %119 = vmatpush.msra.mxu0 %v86
    %120 = vmatpush.msra.mxu0 %v84
    %121 = vmatpush.msra.mxu0 %v82
    %122 = vmatpush.msra.mxu0 %v80
    %123 = vmatpush.msra.mxu0 %v78
    %124 = vmatpush.msra.mxu0 %v76
    %125 = vmatpush.msra.mxu0 %v74
    %126 = vmatpush.msra.mxu0 %v72
    %127 = vmatpush.msra.mxu0 %v70
    %128 = vmatpush.msra.mxu0 %v68
    %129 = vmatpush.msra.mxu0 %v66
    %130 = vmatpush.msra.mxu0 %v64
    %131 = vmatpush.msra.mxu0 %v62
    %132 = vmatpush.msra.mxu0 %v60
    %133 = vmatmul.f32.gmra.mxu0 %v58
    %v134 = vpop.f32.mrf.mxu0
    %v135 = vadd.f32 %v94, %v134
    %136 = vdwg.mxu0
    %v137 = vmax.f32 %v115, 0.0
    %v138 = vxor.u32 %v135, 2147483648
    %v139 = vmul.f32 %v138, 1.442695
    %v140 = vpow.pop %v139
    %v141 = vadd.f32 %v140, 1.0
    %v142 = vrcp.pop %v141
    %v143 = vmul.f32 %v141, %v142
    %v144 = vsub.f32 1.0, %v143
    %v145 = vmul.f32 %v142, %v144
    %v146 = vadd.f32 %v142, %v145
    %vm147 = vweird.f32 %v141
    %vm148 = vweird.f32 %v142
    %vm149 = vmor %vm147, %vm148
    %v150 = vsel %vm149, %v142, %v146
    %v151 = vand.u32 2147483647, %v141
    %vm152 = vcmp.eq.f32.partialorder %v151, 8.507059e+37
    %v153 = vand.u32 %v141, 2147483648
    %v154 = vor.u32 1.1754944e-38, %v153
    %v155 = vsel %vm152, %v154, %v150
    %v156 = vmul.f32 1.0, %v155
    %v157 = vsub.f32 %v137, %v58
    %v158 = vmul.f32 %v156, %v157
    %v159 = vadd.f32 %v158, %v58
    %160 = vst [vmem:[#allocation8] sm:$0xff] %v159
    // Predicated region
    $region26: #{tpu_custom_call.1} parent=1 // pred_check
      _
    $region27: #{tpu_custom_call.1} parent=1 // pred_check_branch
      %162 = sbr.rel (0) target = $region29
    $region28: #{tpu_custom_call.1} parent=1 // pred_region
      %164 = vsyncadd [#allocation4], 0
      %s166 = sshll.u32 [#allocation8], 4
      %s167 = int_to_ptr.vmem [resolvable:$true] %s166
      %s168 = sshll.u32 %s3, 4
      %s169 = int_to_ptr.hbm [resolvable:$true] %s168
      %171 = dma.vmem_to_hbm [thread:$0]  %s167, 128, %s169, [#allocation4]
    $region29: #{tpu_custom_call.1} parent=1 // pred_fallthru
      _
    // Predicated region
    $region30: #{tpu_custom_call.1} parent=1 // pred_check
      _
    $region31: #{tpu_custom_call.1} parent=1 // pred_check_branch
      %173 = sbr.rel (0) target = $region33
    $region32: #{tpu_custom_call.1} parent=1 // pred_region
      %175 = dma.done [#allocation4], 128
    $region33: #{tpu_custom_call.1} parent=1 // pred_fallthru
      _
    %176 = vsyncpa [#allocation3], 1
    %177 = vsyncpa [#allocation6], 1
    %178 = vsyncpa [#allocation4], 1

</llo_original>
